<compile_context>
chip_gen: v7x
topology: tpu7x:2x2x1
jax: 0.10.0
libtpu: 0.0.40
codegen_flags: <defaults>
</compile_context>

<pallas_src>
import functools

import jax
import jax.numpy as jnp
from jax.experimental import pallas as pl
from jax.experimental.pallas import tpu as pltpu

_LANES = 128


def _dice_sums_kernel(logits_ref, targets_ref, out_ref, *,
                      block_rows, j_per_core, core_split,
                      rows_full, lanes_rem, needs_mask):
    """grid = (N, core_split, j_per_core); last axis reduces over features."""
    c = pl.program_id(1)
    j = pl.program_id(2)

    @pl.when(j == 0)
    def _init():
        out_ref[...] = jnp.zeros_like(out_ref)

    def accumulate(mask_tail):
        x = logits_ref[0].astype(jnp.float32)        # (block_rows, 128)
        t = targets_ref[0].astype(jnp.float32)       # (block_rows, 128)
        p = jax.nn.sigmoid(x)
        if mask_tail:
            # Row/lane mask against the valid flattened length. Covers the
            # wrapper's lane padding and the (undefined) rows of a partially
            # out-of-bounds last block. Row-based comparison avoids int32
            # overflow for huge per-sample feature counts.
            row = jax.lax.broadcasted_iota(jnp.int32, (block_rows, _LANES), 0)
            lane = jax.lax.broadcasted_iota(jnp.int32, (block_rows, _LANES), 1)
            row_g = (c * j_per_core + j) * block_rows + row
            ok = (row_g < rows_full) | ((row_g == rows_full) &
                                        (lane < lanes_rem))
            # jnp.where (not p*ok) so any NaN/Inf from OOB garbage is discarded.
            p = jnp.where(ok, p, 0.0)
            t = jnp.where(ok, t, 0.0)
        # Sublane-only partial reductions fused into one lane-dense (3,128)
        # update of the resident output block; the cross-lane reduce is
        # deferred to the tiny JAX epilogue.
        partial = jnp.concatenate(
            [jnp.sum(p * t, axis=0, keepdims=True),
             jnp.sum(p, axis=0, keepdims=True),
             jnp.sum(t, axis=0, keepdims=True)], axis=0)       # (3, 128)
        out_ref[0, 0] += partial

    if needs_mask:
        # Only the globally-last block can contain padded / OOB elements, so
        # the iota + compare + select cost is only paid on that one step.
        is_last = jnp.logical_and(c == core_split - 1, j == j_per_core - 1)

        @pl.when(is_last)
        def _():
            accumulate(True)

        @pl.when(jnp.logical_not(is_last))
        def _():
            accumulate(False)
    else:
        accumulate(False)


def soft_dice_loss(logits, targets, *, target_block_bytes=4 * 1024 * 1024):
    """Pallas implementation of SoftDiceLoss.forward.

    Inputs: NCHW (or any shape with leading batch dim). Float inputs stream in
    their native dtype (do not pre-cast bf16 to f32); bool/int targets are
    streamed as bf16 (exact for {0,1} masks). All math is f32 in-kernel.
    """
    n = logits.shape[0]
    lf = logits.reshape(n, -1)
    tf = targets.reshape(n, -1)
    if not jnp.issubdtype(lf.dtype, jnp.floating):
        lf = lf.astype(jnp.float32)
    if not jnp.issubdtype(tf.dtype, jnp.floating):
        # bf16 is exact for binary {0,1} masks and halves HBM traffic vs f32.
        # Soft / continuous targets (already floating) keep their dtype.
        tf = tf.astype(jnp.bfloat16)
    d = lf.shape[1]

    # Lane-dense layout (N, rows, 128). Pad the flattened dim to a multiple of
    # 128 only when necessary; the padded tail is masked inside the kernel.
    dp = -(-d // _LANES) * _LANES
    if dp != d:
        lf = jnp.pad(lf, ((0, 0), (0, dp - d)))
        tf = jnp.pad(tf, ((0, 0), (0, dp - d)))
    rtot = dp // _LANES
    lf = lf.reshape(n, rtot, _LANES)
    tf = tf.reshape(n, rtot, _LANES)

    # ---- block / core-split planning (all static Python ints) ----
    target_block_bytes = min(int(target_block_bytes), 8 * 1024 * 1024)
    itemsize = max(lf.dtype.itemsize, tf.dtype.itemsize)
    r_budget = max(8, (target_block_bytes // (_LANES * itemsize)) // 8 * 8)

    if rtot <= r_budget:
        block_rows, num_j = rtot, 1              # full extent in one block
    else:
        block_rows, num_j = r_budget, -(-rtot // r_budget)

    def _round8(v):
        return -(-v // 8) * 8

    # v7x: split the reduction axis across the 2 TensorCores when the batch
    # axis alone would leave a core idle (odd N, incl. N == 1). Only taken
    # when no fully-OOB block results; neutral on single-TC chips.
    core_split, j_per_core = 1, num_j
    if n % 2 == 1:
        if num_j == 1 and rtot >= 16:
            br2 = _round8(-(-rtot // 2))
            if br2 < rtot:
                core_split, j_per_core, block_rows = 2, 1, br2
        elif num_j % 2 == 0:
            core_split, j_per_core = 2, num_j // 2
        else:  # odd num_j >= 3: try one extra block to make it even
            nj2 = num_j + 1
            br2 = _round8(-(-rtot // nj2))
            if br2 >= 8 and (nj2 - 1) * br2 < rtot:
                core_split, j_per_core, block_rows = 2, nj2 // 2, br2

    # Mask needed iff the grid covers more elements than are valid.
    needs_mask = (core_split * j_per_core * block_rows * _LANES) != d

    # Explicit scoped-VMEM limit: 2 pipeline buffers per input + margin for the
    # output tile and internal scratch. Stays under v7x's 64 MiB physical VMEM.
    block_bytes = block_rows * _LANES * (lf.dtype.itemsize + tf.dtype.itemsize)
    vmem_limit = int(min(max(2 * block_bytes + (8 << 20), 16 << 20), 48 << 20))

    kernel = functools.partial(
        _dice_sums_kernel,
        block_rows=block_rows, j_per_core=j_per_core, core_split=core_split,
        rows_full=d // _LANES, lanes_rem=d % _LANES, needs_mask=needs_mask)

    sums = pl.pallas_call(
        kernel,
        out_shape=jax.ShapeDtypeStruct((n, core_split, 3, _LANES), jnp.float32),
        grid_spec=pltpu.PrefetchScalarGridSpec(
            num_scalar_prefetch=0,
            grid=(n, core_split, j_per_core),
            in_specs=[
                pl.BlockSpec((1, block_rows, _LANES),
                             lambda i, c, j: (i, c * j_per_core + j, 0)),
                pl.BlockSpec((1, block_rows, _LANES),
                             lambda i, c, j: (i, c * j_per_core + j, 0)),
            ],
            out_specs=pl.BlockSpec((1, 1, 3, _LANES),
                                   lambda i, c, j: (i, c, 0, 0)),
        ),
        compiler_params=pltpu.CompilerParams(
            dimension_semantics=("parallel", "parallel", "arbitrary"),
            vmem_limit_bytes=vmem_limit),
    )(lf, tf)

    # Deferred cross-lane + cross-core reduce and scalar epilogue (tiny JAX).
    per_sample = sums.sum(axis=(1, 3))            # (n, 3)
    inter, s1, s2 = per_sample[:, 0], per_sample[:, 1], per_sample[:, 2]
    smooth = 1.0
    score = 2.0 * (inter + smooth) / (s1 + s2 + smooth)
    return 1.0 - jnp.sum(score) / n


def _reference(logits, targets):
    n = logits.shape[0]
    smooth = 1.0
    probs = jax.nn.sigmoid(logits.astype(jnp.float32))
    m1 = probs.reshape(n, -1)
    m2 = targets.reshape(n, -1).astype(jnp.float32)
    inter = (m1 * m2).sum(1)
    score = 2.0 * (inter + smooth) / (m1.sum(1) + m2.sum(1) + smooth)
    return 1.0 - score.sum() / n


if __name__ == "__main__":
    key = jax.random.PRNGKey(0)
    k1, k2, k3, k4, k5, k6, k7, k8 = jax.random.split(key, 8)

    # 1) Primary case: N,C,H,W = 2,4,16,16 (D=1024, lane-aligned, single step).
    logits = jax.random.normal(k1, (2, 4, 16, 16), dtype=jnp.float32)
    targets = jax.random.bernoulli(k2, 0.3, (2, 4, 16, 16)).astype(jnp.float32)
    loss = jax.block_until_ready(soft_dice_loss(logits, targets))
    ref = _reference(logits, targets)
    assert jnp.allclose(loss, ref, atol=1e-4, rtol=1e-4), (loss, ref)

    # 2) Ragged, multi-step: D = 4*33*33 = 4356 (not a multiple of 128); tiny
    #    block budget forces several reduction steps + the masked tail path.
    logits2 = jax.random.normal(k3, (2, 4, 33, 33), dtype=jnp.float32)
    targets2 = jax.random.bernoulli(k4, 0.3, (2, 4, 33, 33)).astype(jnp.float32)
    loss2 = jax.block_until_ready(
        soft_dice_loss(logits2, targets2, target_block_bytes=4096))
    ref2 = _reference(logits2, targets2)
    assert jnp.allclose(loss2, ref2, atol=1e-4, rtol=1e-4), (loss2, ref2)

    # 3) Odd batch + boolean targets: exercises the bf16-target streaming and
    #    the core-split (num_j == 1 -> two half-blocks on a parallel axis).
    logits3 = jax.random.normal(k5, (3, 4, 32, 32), dtype=jnp.float32)
    targets3 = jax.random.bernoulli(k6, 0.3, (3, 4, 32, 32))   # bool
    loss3 = jax.block_until_ready(soft_dice_loss(logits3, targets3))
    ref3 = _reference(logits3, targets3)
    assert jnp.allclose(loss3, ref3, atol=1e-4, rtol=1e-4), (loss3, ref3)

    # 4) N=1 with an odd block count: exercises the odd->even reduction-axis
    #    adjustment for the core split plus the masked last block.
    logits4 = jax.random.normal(k7, (1, 13, 32, 32), dtype=jnp.float32)
    targets4 = jax.random.bernoulli(k8, 0.3, (1, 13, 32, 32)).astype(jnp.float32)
    loss4 = jax.block_until_ready(
        soft_dice_loss(logits4, targets4, target_block_bytes=20480))
    ref4 = _reference(logits4, targets4)
    assert jnp.allclose(loss4, ref4, atol=1e-4, rtol=1e-4), (loss4, ref4)

    print("KERNEL_OK")
</pallas_src>

<mosaic_0001>
module attributes {stable_mosaic.version = 11 : i64} {
  func.func @_dice_sums_kernel(%arg0: i32, %arg1: i32, %arg2: i32, %arg3: memref<1x8x128xf32, #tpu.memory_space<vmem>>, %arg4: memref<1x8x128xf32, #tpu.memory_space<vmem>>, %arg5: memref<1x1x3x128xf32, #tpu.memory_space<vmem>>) attributes {dimension_semantics = [#tpu.dimension_semantics<parallel>, #tpu.dimension_semantics<parallel>, #tpu.dimension_semantics<arbitrary>], iteration_bounds = array<i64: 2, 1, 1>, scalar_prefetch = 0 : i64, scratch_operands = 0 : i64, tpu.core_type = #tpu.core_type<tc>, window_params = [{transform_indices = @transform_0, window_bounds = array<i64: 1, 8, 128>}, {transform_indices = @transform_1, window_bounds = array<i64: 1, 8, 128>}, {transform_indices = @transform_2, window_bounds = array<i64: 1, 1, 3, 128>}]} {
    %c0_i32 = arith.constant 0 : i32
    %0 = arith.cmpi eq, %arg2, %c0_i32 : i32
    %1 = arith.extui %0 : i1 to i32
    %c0_i32_0 = arith.constant 0 : i32
    %2 = arith.cmpi ne, %1, %c0_i32_0 : i32
    scf.if %2 {
      %cst_17 = arith.constant 0.000000e+00 : f32
      %26 = vector.broadcast %cst_17 : f32 to vector<1x1x3x128xf32>
      %c0_18 = arith.constant 0 : index
      %c0_19 = arith.constant 0 : index
      %c0_20 = arith.constant 0 : index
      %c0_21 = arith.constant 0 : index
      %27 = vector.load %arg5[%c0_18, %c0_19, %c0_20, %c0_21] : memref<1x1x3x128xf32, #tpu.memory_space<vmem>>, vector<1x1x3x128xf32>
      tpu.vector_store %arg5[%c0_18, %c0_19, %c0_20, %c0_21], %26 {strides = array<i32>} : memref<1x1x3x128xf32, #tpu.memory_space<vmem>>, vector<1x1x3x128xf32>,
    } else {
    }
    %c0 = arith.constant 0 : index
    %c0_1 = arith.constant 0 : index
    %c0_2 = arith.constant 0 : index
    %3 = vector.load %arg3[%c0, %c0_1, %c0_2] : memref<1x8x128xf32, #tpu.memory_space<vmem>>, vector<1x8x128xf32>
    %4 = vector.shape_cast %3 : vector<1x8x128xf32> to vector<8x128xf32>
    %c0_3 = arith.constant 0 : index
    %c0_4 = arith.constant 0 : index
    %c0_5 = arith.constant 0 : index
    %5 = vector.load %arg4[%c0_3, %c0_4, %c0_5] : memref<1x8x128xf32, #tpu.memory_space<vmem>>, vector<1x8x128xf32>
    %6 = vector.shape_cast %5 : vector<1x8x128xf32> to vector<8x128xf32>
    %7 = arith.negf %4 : vector<8x128xf32>
    %8 = math.exp %7 : vector<8x128xf32>
    %cst = arith.constant 1.000000e+00 : f32
    %9 = vector.broadcast %cst : f32 to vector<8x128xf32>
    %10 = arith.addf %9, %8 : vector<8x128xf32>
    %11 = arith.divf %9, %10 : vector<8x128xf32>
    %12 = arith.mulf %11, %6 : vector<8x128xf32>
    %cst_6 = arith.constant dense<0.000000e+00> : vector<128xf32>
    %13 = vector.multi_reduction <add>, %12, %cst_6 [0] : vector<8x128xf32> to vector<128xf32>
    %14 = vector.shape_cast %13 : vector<128xf32> to vector<1x128xf32>
    %cst_7 = arith.constant dense<0.000000e+00> : vector<128xf32>
    %15 = vector.multi_reduction <add>, %11, %cst_7 [0] : vector<8x128xf32> to vector<128xf32>
    %16 = vector.shape_cast %15 : vector<128xf32> to vector<1x128xf32>
    %cst_8 = arith.constant dense<0.000000e+00> : vector<128xf32>
    %17 = vector.multi_reduction <add>, %6, %cst_8 [0] : vector<8x128xf32> to vector<128xf32>
    %18 = vector.shape_cast %17 : vector<128xf32> to vector<1x128xf32>
    %19 = tpu.concatenate %14, %16, %18 in 0 : vector<1x128xf32>, vector<1x128xf32>, vector<1x128xf32> -> vector<3x128xf32>
    %c0_9 = arith.constant 0 : index
    %c0_10 = arith.constant 0 : index
    %c0_11 = arith.constant 0 : index
    %c0_12 = arith.constant 0 : index
    %20 = vector.load %arg5[%c0_9, %c0_10, %c0_11, %c0_12] : memref<1x1x3x128xf32, #tpu.memory_space<vmem>>, vector<1x1x3x128xf32>
    %21 = vector.shape_cast %20 : vector<1x1x3x128xf32> to vector<3x128xf32>
    %22 = arith.addf %21, %19 : vector<3x128xf32>
    %c0_13 = arith.constant 0 : index
    %c0_14 = arith.constant 0 : index
    %c0_15 = arith.constant 0 : index
    %c0_16 = arith.constant 0 : index
    %23 = vector.load %arg5[%c0_13, %c0_14, %c0_15, %c0_16] : memref<1x1x3x128xf32, #tpu.memory_space<vmem>>, vector<1x1x3x128xf32>
    %24 = vector.shape_cast %23 : vector<1x1x3x128xf32> to vector<3x128xf32>
    %25 = vector.shape_cast %22 : vector<3x128xf32> to vector<1x1x3x128xf32>
    tpu.vector_store %arg5[%c0_13, %c0_14, %c0_15, %c0_16], %25 {strides = array<i32>} : memref<1x1x3x128xf32, #tpu.memory_space<vmem>>, vector<1x1x3x128xf32>,
    return
  }
  func.func @transform_0(%arg0: i32, %arg1: i32, %arg2: i32) -> (i32, i32, i32) {
    %c1_i32 = arith.constant 1 : i32
    %0 = arith.muli %arg1, %c1_i32 : i32
    %1 = arith.addi %0, %arg2 : i32
    %c0_i32 = arith.constant 0 : i32
    %c0_i32_0 = arith.constant 0 : i32
    return %arg0, %1, %c0_i32 : i32, i32, i32
  }
  func.func @transform_1(%arg0: i32, %arg1: i32, %arg2: i32) -> (i32, i32, i32) {
    %c1_i32 = arith.constant 1 : i32
    %0 = arith.muli %arg1, %c1_i32 : i32
    %1 = arith.addi %0, %arg2 : i32
    %c0_i32 = arith.constant 0 : i32
    %c0_i32_0 = arith.constant 0 : i32
    return %arg0, %1, %c0_i32 : i32, i32, i32
  }
  func.func @transform_2(%arg0: i32, %arg1: i32, %arg2: i32) -> (i32, i32, i32, i32) {
    %c0_i32 = arith.constant 0 : i32
    %c0_i32_0 = arith.constant 0 : i32
    %c0_i32_1 = arith.constant 0 : i32
    return %arg0, %arg1, %c0_i32, %c0_i32_0 : i32, i32, i32, i32
  }
}

</mosaic_0001>

<llo_original>
// kernel: tpu_custom_call.1
$region0: #{tpu_custom_call.1}
  #allocation0 [shape = 'u32[]', space=smem, size = 0x4, offset = 0x4, fixed_abs, tag = 'smem constant byte address 0x4 - core index']
  #allocation1 [shape = 'u32[144,128]{1,0:T(1,128)}', space=vmem, size = 0x12000, scoped, tag = 'internal scratch']
  %s0 = inlined_call_operand.hbm [shape: f32[2,8,128], index: 0, kind: input, shape index: {}]
  %s1 = inlined_call_operand.hbm [shape: f32[2,8,128], index: 1, kind: input, shape index: {}]
  %s2 = inlined_call_operand.vmem [shape: f32[2,1,3,128], index: 2, kind: output, shape index: {}]
  %s3 = sld [smem:[#allocation0]]
  $region53: #{tpu_custom_call.1} parent=0
    _
  %s5 = ssub.s32 1, %s3
  %s6 = scalar_select 0, %s5, %s3
  $region1: #{tpu_custom_call.1} parent=0
    #allocation2 [shape = 'u8[8192]{0}', space=vmem, size = 0x2000, scoped, tag = 'input window, operand 0']
    #allocation3 [shape = 's32[2]{0}', space=sflag, size = 0x8, scoped, tag = 'scoped memory for tpu_custom_call.1']
    #allocation4 [shape = 'u8[8192]{0}', space=vmem, size = 0x2000, scoped, tag = 'input window, operand 1']
    #allocation5 [shape = 's32[2]{0}', space=sflag, size = 0x8, scoped, tag = 'scoped memory for tpu_custom_call.1']
    %7 = vsyncpa [#allocation3], 0
    %s8 = scalar_lea.sflag [#allocation3], 1
    %9 = vsyncpa %s8, 0
    %10 = vsyncpa [#allocation5], 0
    %s11 = scalar_lea.sflag [#allocation5], 1
    %12 = vsyncpa %s11, 0
    loop: start=0, step=1, limit=4
    $region2: #{tpu_custom_call.1} parent=1 // loop_pre_header
      _
    $region3: #{tpu_custom_call.1} parent=1 // loop_header
      %s14 = sphi 0, %s18
      %p15 = scmp.ge.s32.totalorder %s14, 4
      %s21 = sphi 0, %s40
      %s22 = sphi 0, %s36
      %s23 = sphi 0, %s32
      %s24 = sphi 0, %s21
      %s25 = sphi 0, %s22
      %s26 = sphi 0, %s23
      %s27 = sphi 0, %s24
      %s28 = sphi 0, %s25
      %s29 = sphi 0, %s26
      %s47 = sphi 0, %s49
      %s50 = sphi 0, %s47
      %s51 = sphi 0, %s50
      %s67 = sphi 0, %s51
      %s77 = sphi 0, %s79
      %s80 = sphi 0, %s77
      %s81 = sphi 0, %s80
      %s97 = sphi 0, %s81
      %s105 = sphi 0, %s107
      %s108 = sphi 0, %s105
      %s109 = sphi 0, %s108
      %s125 = sphi 0, %s109
    $region4: #{tpu_custom_call.1} parent=1 // loop_header_branch
      %17 = sbr.rel (%p15) target = $region8
    $region5: #{tpu_custom_call.1} parent=1 // loop_body
      %s19 = ssub.s32 %s14, 1
      %s20 = ssub.s32 %s14, 2
      %s30 = sadd.s32 1, %s23
      %p31 = scmp.ge.s32.totalorder %s30, 1
      %s32 = scalar_select %p31, 0, %s30
      %s33 = sadd.s32 1, %s22
      %s34 = scalar_select %p31, %s33, %s22
      %p35 = scmp.ge.s32.totalorder %s34, 1
      %s36 = scalar_select %p35, 0, %s34
      %s37 = sadd.s32 1, %s21
      %s38 = scalar_select %p35, %s37, %s21
      %p39 = scmp.ge.s32.totalorder %s38, 2
      %s40 = scalar_select %p39, 0, %s38
      %s41 = sadd.s32 %s22, %s23
      %s42 = sadd.s32 %s36, %s32
      %s43 = ssub.s32 %s21, %s40
      %s44 = ssub.s32 %s41, %s42
      %s45 = sor.u32 %s43, %s44
      %p46 = scmp.eq.s32.totalorder %s45, 0
      %s48 = sadd.s32 %s47, 1
      %s49 = scalar_select %p46, %s47, %s48
      %p52 = pneg %p46
      %p53 = scmp.eq.s32.totalorder %s14, 1
      %p54 = por %p52, %p53
      %p55 = scmp.ne.s32.totalorder %s47, %s50
      %p56 = scmp.eq.s32.totalorder %s14, 0
      %p57 = por %p55, %p56
      %p58 = scmp.ne.s32.totalorder %s47, %s50
      %p59 = scmp.eq.s32.totalorder %s19, 1
      %p60 = por %p58, %p59
      %p61 = scmp.ne.s32.totalorder %s50, %s51
      %p62 = scmp.eq.s32.totalorder %s19, 0
      %p63 = por %p61, %p62
      %p64 = scmp.ne.s32.totalorder %s50, %s51
      %p65 = scmp.eq.s32.totalorder %s20, 1
      %p66 = por %p64, %p65
      %p68 = scmp.ne.s32.totalorder %s51, %s67
      %p69 = scmp.eq.s32.totalorder %s20, 0
      %p70 = por %p68, %p69
      %s71 = sadd.s32 %s22, %s23
      %s72 = sadd.s32 %s36, %s32
      %s73 = ssub.s32 %s21, %s40
      %s74 = ssub.s32 %s71, %s72
      %s75 = sor.u32 %s73, %s74
      %p76 = scmp.eq.s32.totalorder %s75, 0
      %s78 = sadd.s32 %s77, 1
      %s79 = scalar_select %p76, %s77, %s78
      %p82 = pneg %p76
      %p83 = scmp.eq.s32.totalorder %s14, 1
      %p84 = por %p82, %p83
      %p85 = scmp.ne.s32.totalorder %s77, %s80
      %p86 = scmp.eq.s32.totalorder %s14, 0
      %p87 = por %p85, %p86
      %p88 = scmp.ne.s32.totalorder %s77, %s80
      %p89 = scmp.eq.s32.totalorder %s19, 1
      %p90 = por %p88, %p89
      %p91 = scmp.ne.s32.totalorder %s80, %s81
      %p92 = scmp.eq.s32.totalorder %s19, 0
      %p93 = por %p91, %p92
      %p94 = scmp.ne.s32.totalorder %s80, %s81
      %p95 = scmp.eq.s32.totalorder %s20, 1
      %p96 = por %p94, %p95
      %p98 = scmp.ne.s32.totalorder %s81, %s97
      %p99 = scmp.eq.s32.totalorder %s20, 0
      %p100 = por %p98, %p99
      %s101 = ssub.s32 %s21, %s40
      %s102 = ssub.s32 %s22, %s36
      %s103 = sor.u32 %s101, %s102
      %p104 = scmp.eq.s32.totalorder %s103, 0
      %s106 = sadd.s32 %s105, 1
      %s107 = scalar_select %p104, %s105, %s106
      %p110 = pneg %p104
      %p111 = scmp.eq.s32.totalorder %s14, 1
      %p112 = por %p110, %p111
      %p113 = scmp.ne.s32.totalorder %s105, %s108
      %p114 = scmp.eq.s32.totalorder %s14, 0
      %p115 = por %p113, %p114
      %p116 = scmp.ne.s32.totalorder %s105, %s108
      %p117 = scmp.eq.s32.totalorder %s19, 1
      %p118 = por %p116, %p117
      %p119 = scmp.ne.s32.totalorder %s108, %s109
      %p120 = scmp.eq.s32.totalorder %s19, 0
      %p121 = por %p119, %p120
      %p122 = scmp.ne.s32.totalorder %s108, %s109
      %p123 = scmp.eq.s32.totalorder %s20, 1
      %p124 = por %p122, %p123
      %p126 = scmp.ne.s32.totalorder %s109, %s125
      %p127 = scmp.eq.s32.totalorder %s20, 0
      %p128 = por %p126, %p127
      %p129 = scmp.le.s32.totalorder 1, %s14
      %p130 = scmp.lt.s32.totalorder %s14, 3
      %p131 = pnand %p129, %p130
      %p132 = pneg %p131
      // Predicated region
      $region9: #{tpu_custom_call.1} parent=5 // pred_check
        _
      $region10: #{tpu_custom_call.1} parent=5 // pred_check_branch
        %134 = sbr.rel (%p131) target = $region12
      $region11: #{tpu_custom_call.1} parent=5 // pred_region
        %s135 = ssub.s32 %s14, 1
      $region12: #{tpu_custom_call.1} parent=5 // pred_fallthru
        _
      %p136 = scmp.lt.s32.totalorder %s14, 2
      // Predicated region
      $region13: #{tpu_custom_call.1} parent=5 // pred_check
        %p137 = pneg %p136
      $region14: #{tpu_custom_call.1} parent=5 // pred_check_branch
        %139 = sbr.rel (%p137) target = $region16
      $region15: #{tpu_custom_call.1} parent=5 // pred_region
        // Predicated region
        $region17: #{tpu_custom_call.1} parent=15 // pred_check
          %p140 = pneg %p57
        $region18: #{tpu_custom_call.1} parent=15 // pred_check_branch
          %142 = sbr.rel (%p140) target = $region20
        $region19: #{tpu_custom_call.1} parent=15 // pred_region
          %s143 = sand.u32 %s47, 1
          %s144 = scalar_lea.sflag [#allocation3], %s143
          %s145 = sand.u32 %s47, 1
          %s146 = smul.addr %s145, 8
          %s147 = scalar_lea.vmem [#allocation2], %s146
          %s148 = sadd.s32 %s22, %s23
          %s150 = ssub.s32 128, 128
          %151 = vsyncadd %s144, %s150
          %s152 = sadd.s32 %s148, %s21
          %s153 = smul.addr %s152, 128
          %s154 = scalar_lea.hbm %s0, %s153
          %s156 = sshll.u32 %s147, 4
          %s157 = int_to_ptr.vmem [resolvable:$true] %s156
          %159 = dma.hbm_to_vmem [thread:$0]  %s154, 128, %s157, %s144
        $region20: #{tpu_custom_call.1} parent=15 // pred_fallthru
          _
        // Predicated region
        $region21: #{tpu_custom_call.1} parent=15 // pred_check
          %p160 = pneg %p87
        $region22: #{tpu_custom_call.1} parent=15 // pred_check_branch
          %162 = sbr.rel (%p160) target = $region24
        $region23: #{tpu_custom_call.1} parent=15 // pred_region
          %s163 = sand.u32 %s77, 1
          %s164 = scalar_lea.sflag [#allocation5], %s163
          %s165 = sand.u32 %s77, 1
          %s166 = smul.addr %s165, 8
          %s167 = scalar_lea.vmem [#allocation4], %s166
          %s168 = sadd.s32 %s22, %s23
          %s170 = ssub.s32 128, 128
          %171 = vsyncadd %s164, %s170
          %s172 = sadd.s32 %s168, %s21
          %s173 = smul.addr %s172, 128
          %s174 = scalar_lea.hbm %s1, %s173
          %s176 = sshll.u32 %s167, 4
          %s177 = int_to_ptr.vmem [resolvable:$true] %s176
          %179 = dma.hbm_to_vmem [thread:$0]  %s174, 128, %s177, %s164
        $region24: #{tpu_custom_call.1} parent=15 // pred_fallthru
          _
      $region16: #{tpu_custom_call.1} parent=5 // pred_fallthru
        _
      %p180 = scmp.le.s32.totalorder 1, %s14
      %p181 = scmp.lt.s32.totalorder %s14, 3
      %p182 = pnand %p180, %p181
      %p183 = pneg %p182
      // Predicated region
      $region25: #{tpu_custom_call.1} parent=5 // pred_check
        _
      $region26: #{tpu_custom_call.1} parent=5 // pred_check_branch
        %185 = sbr.rel (%p182) target = $region28
      $region27: #{tpu_custom_call.1} parent=5 // pred_region
        %s186 = ssub.s32 %s14, 1
        %s187 = sand.u32 %s50, 1
        %s188 = scalar_lea.sflag [#allocation3], %s187
        %s189 = sand.u32 %s50, 1
        %s190 = smul.addr %s189, 8
        %s191 = scalar_lea.vmem [#allocation2], %s190
        // Predicated region
        $region29: #{tpu_custom_call.1} parent=27 // pred_check
          %p192 = pneg %p63
        $region30: #{tpu_custom_call.1} parent=27 // pred_check_branch
          %194 = sbr.rel (%p192) target = $region32
        $region31: #{tpu_custom_call.1} parent=27 // pred_region
          %195 = dma.done %s188, 128
        $region32: #{tpu_custom_call.1} parent=27 // pred_fallthru
          _
        %s196 = sand.u32 %s80, 1
        %s197 = scalar_lea.sflag [#allocation5], %s196
        %s198 = sand.u32 %s80, 1
        %s199 = smul.addr %s198, 8
        %s200 = scalar_lea.vmem [#allocation4], %s199
        // Predicated region
        $region33: #{tpu_custom_call.1} parent=27 // pred_check
          %p201 = pneg %p93
        $region34: #{tpu_custom_call.1} parent=27 // pred_check_branch
          %203 = sbr.rel (%p201) target = $region36
        $region35: #{tpu_custom_call.1} parent=27 // pred_region
          %204 = dma.done %s197, 128
        $region36: #{tpu_custom_call.1} parent=27 // pred_fallthru
          _
        %s205 = sand.u32 %s50, 1
        %s206 = scalar_lea.sflag [#allocation3], %s205
        %s207 = sand.u32 %s50, 1
        %s208 = smul.addr %s207, 8
        %s209 = scalar_lea.vmem [#allocation2], %s208
        %p210 = pneg %p63
        %p211 = pneg %p60
        %s212 = sand.u32 %s80, 1
        %s213 = scalar_lea.sflag [#allocation5], %s212
        %s214 = sand.u32 %s80, 1
        %s215 = smul.addr %s214, 8
        %s216 = scalar_lea.vmem [#allocation4], %s215
        %p217 = pneg %p93
        %p218 = pneg %p90
        %p219 = pneg %p121
        %p220 = pneg %p118
        %p221 = scmp.lt.s32.totalorder %s24, 1
        %s222 = scalar_select %p221, %s24, 1
        %p223 = scmp.lt.s32.totalorder %s25, 0
        %s224 = scalar_select %p223, %s25, 0
        %s225 = sadd.s32 %s224, %s222
        %s226 = smul.addr %s225, 4
        %s227 = scalar_lea.vmem %s2, %s226
        %s228 = sadd.s32 %s25, %s26
        %s229 = sadd.s32 %s25, %s26
        %p230 = scmp.lt.s32.totalorder %s24, 1
        %s231 = scalar_select %p230, %s24, 1
        %p232 = scmp.lt.s32.totalorder %s25, 0
        %s233 = scalar_select %p232, %s25, 0
        %s234 = sadd.s32 %s233, %s231
        %s235 = smul.addr %s234, 4
        %s236 = scalar_lea.vmem %s2, %s235
        %p237 = scmp.eq.s32.totalorder %s26, 0
        // Predicated region
        $region37: #{tpu_custom_call.1} parent=27 // pred_check
          %p238 = pneg %p237
        $region38: #{tpu_custom_call.1} parent=27 // pred_check_branch
          %240 = sbr.rel (%p238) target = $region40
        $region39: #{tpu_custom_call.1} parent=27 // pred_region
          %241 = vst [vmem:[%s236] sm:$0x7] 0.0
        $region40: #{tpu_custom_call.1} parent=27 // pred_fallthru
          _
        %v242 = vld [vmem:[%s191] sm:$0xff]
        %v243 = vld [vmem:[%s200] sm:$0xff]
        %v244 = vxor.u32 %v242, 2147483648
        %v245 = vmul.f32 %v244, 1.442695
        %v246 = vpow.pop %v245
        %v247 = vadd.f32 %v246, 1.0
        %v248 = vrcp.pop %v247
        %v249 = vmul.f32 1.0, %v248
        %v250 = vmul.f32 %v249, %v243
        %v251 = vrot.slane %v250, 4
        %v252 = vadd.f32 %v250, %v251
        %v253 = vrot.slane %v252, 2
        %v254 = vadd.f32 %v252, %v253
        %v255 = vrot.slane %v254, 1
        %v256 = vadd.f32 %v254, %v255
        %v257 = vrot.slane %v249, 4
        %v258 = vadd.f32 %v249, %v257
        %v259 = vrot.slane %v258, 2
        %v260 = vadd.f32 %v258, %v259
        %v261 = vrot.slane %v260, 1
        %v262 = vadd.f32 %v260, %v261
        %v263 = vrot.slane %v243, 4
        %v264 = vadd.f32 %v243, %v263
        %v265 = vrot.slane %v264, 2
        %v266 = vadd.f32 %v264, %v265
        %v267 = vrot.slane %v266, 1
        %v268 = vadd.f32 %v266, %v267
        %vm269 = vcmask 1040384
        %v270 = vsel %vm269, %v256, %v262
        %vm271 = vcmask 1041408
        %v272 = vsel %vm271, %v270, %v268
        %v273 = vld [vmem:[%s236] sm:$0x7]
        %v274 = vadd.f32 %v273, %v272
        %275 = vst [vmem:[%s236] sm:$0x7] %v274
        %p276 = scmp.lt.s32.totalorder %s24, 1
        %s277 = scalar_select %p276, %s24, 1
        %p278 = scmp.lt.s32.totalorder %s25, 0
        %s279 = scalar_select %p278, %s25, 0
        %s280 = sadd.s32 %s279, %s277
        %s281 = smul.addr %s280, 4
        %s282 = scalar_lea.vmem %s2, %s281
        // Predicated region
        $region41: #{tpu_custom_call.1} parent=27 // pred_check
          %p283 = pneg %p118
        $region42: #{tpu_custom_call.1} parent=27 // pred_check_branch
          %285 = sbr.rel (%p283) target = $region44
        $region43: #{tpu_custom_call.1} parent=27 // pred_region
          _
        $region44: #{tpu_custom_call.1} parent=27 // pred_fallthru
          _
      $region28: #{tpu_custom_call.1} parent=5 // pred_fallthru
        _
      %p286 = scmp.le.s32.totalorder 2, %s14
      // Predicated region
      $region45: #{tpu_custom_call.1} parent=5 // pred_check
        %p287 = pneg %p286
      $region46: #{tpu_custom_call.1} parent=5 // pred_check_branch
        %289 = sbr.rel (%p287) target = $region48
      $region47: #{tpu_custom_call.1} parent=5 // pred_region
        %s290 = ssub.s32 %s14, 2
        // Predicated region
        $region49: #{tpu_custom_call.1} parent=47 // pred_check
          %p291 = pneg %p124
        $region50: #{tpu_custom_call.1} parent=47 // pred_check_branch
          %293 = sbr.rel (%p291) target = $region52
        $region51: #{tpu_custom_call.1} parent=47 // pred_region
          %p294 = scmp.lt.s32.totalorder %s27, 1
          %s295 = scalar_select %p294, %s27, 1
          %p296 = scmp.lt.s32.totalorder %s28, 0
          %s297 = scalar_select %p296, %s28, 0
          %s298 = sadd.s32 %s297, %s295
          %s299 = smul.addr %s298, 4
          %s300 = scalar_lea.vmem %s2, %s299
        $region52: #{tpu_custom_call.1} parent=47 // pred_fallthru
          _
      $region48: #{tpu_custom_call.1} parent=5 // pred_fallthru
        _
    $region6: #{tpu_custom_call.1} parent=1 // loop_footer
      %s18 = sadd.s32 1, %s14
    $region7: #{tpu_custom_call.1} parent=1 // loop_footer_branch
      %13 = sbr.rel target = $region3
    $region8: #{tpu_custom_call.1} parent=1 // loop_exit
      _
    %301 = vsyncpa [#allocation3], 1
    %s302 = scalar_lea.sflag [#allocation3], 1
    %303 = vsyncpa %s302, 1
    %304 = vsyncpa [#allocation5], 1
    %s305 = scalar_lea.sflag [#allocation5], 1
    %306 = vsyncpa %s305, 1

</llo_original>
